<compile_context>
chip_gen: v5e
topology: v5e:2x2
jax: 0.10.0
libtpu: 0.0.40
codegen_flags: <defaults>
</compile_context>

<pallas_src>
import jax
import jax.numpy as jnp
from jax.experimental import pallas as pl
from jax.experimental.pallas import tpu as pltpu

LANE = 128
SUBLANE_BF16 = 16


def _round_up(n, m):
    return ((n + m - 1) // m) * m


# ----------------------------------------------------------------------------
# Pallas kernel: fused Linear -> ReLU -> Linear -> ReLU -> Linear
# Operands: x / weights in bf16, biases in f32, f32 MXU accumulation.
# ----------------------------------------------------------------------------
def task_mlp_kernel(x_ref, w0_ref, b0_ref, w1_ref, b1_ref, w2_ref, b2_ref,
                    out_ref):
    # Layer 0: Linear + ReLU
    h = jnp.dot(x_ref[...], w0_ref[...], preferred_element_type=jnp.float32)
    h = jnp.maximum(h + b0_ref[...], 0.0).astype(jnp.bfloat16)

    # Layer 1: Linear + ReLU
    h = jnp.dot(h, w1_ref[...], preferred_element_type=jnp.float32)
    h = jnp.maximum(h + b1_ref[...], 0.0).astype(jnp.bfloat16)

    # Output layer: Linear (no activation), lane-dense 128-wide bf16 store.
    out = jnp.dot(h, w2_ref[...], preferred_element_type=jnp.float32)
    out_ref[...] = (out + b2_ref[...]).astype(out_ref.dtype)


def task_mlp_head(graph_emb, prepped_params, task_num, block_b=None):
    """Fused MLP head on (B, emb_dim) graph embeddings. Returns (B, task_num) f32."""
    w0, b0, w1, b1, w2, b2 = prepped_params
    B, emb_dim = graph_emb.shape
    h0 = w0.shape[1]
    h1 = w1.shape[1]
    t_pad = w2.shape[1]          # task_num padded to 128 lanes

    if block_b is None:
        if B <= 128:
            # Tiny batches: one grid step, only sublane-level row padding.
            block_b = _round_up(max(B, 1), SUBLANE_BF16)
        else:
            # >=2 grid steps so v7x's second TensorCore isn't idle; 256-512
            # tiles amortize per-step overhead on v5e/v6e and stay far below
            # v7x's 64 MiB VMEM (intermediates ~0.5 MiB at 512x128 f32).
            block_b = min(512, _round_up(pl.cdiv(B, 2), LANE))

    grid = (pl.cdiv(B, block_b),)

    # bf16 cast only (no padded copy) — fuses into the encoder epilogue.
    x = graph_emb.astype(jnp.bfloat16)

    flops = 2 * B * (emb_dim * h0 + h0 * h1 + h1 * t_pad)
    bytes_accessed = (
        x.size * 2
        + (w0.size + w1.size + w2.size) * 2
        + (b0.size + b1.size + b2.size) * 4
        + B * t_pad * 2
    )

    out = pl.pallas_call(
        task_mlp_kernel,
        out_shape=jax.ShapeDtypeStruct((B, t_pad), jnp.bfloat16),
        grid_spec=pltpu.PrefetchScalarGridSpec(
            num_scalar_prefetch=0,
            grid=grid,
            in_specs=[
                # activations: tiled over the batch grid axis (K dim unpadded)
                pl.BlockSpec((block_b, emb_dim), lambda i: (i, 0)),
                # weights / biases: constant index_map -> VMEM-resident, one DMA
                pl.BlockSpec((emb_dim, h0), lambda i: (0, 0)),
                pl.BlockSpec((1, h0), lambda i: (0, 0)),
                pl.BlockSpec((h0, h1), lambda i: (0, 0)),
                pl.BlockSpec((1, h1), lambda i: (0, 0)),
                pl.BlockSpec((h1, t_pad), lambda i: (0, 0)),
                pl.BlockSpec((1, t_pad), lambda i: (0, 0)),
            ],
            out_specs=pl.BlockSpec((block_b, t_pad), lambda i: (i, 0)),
        ),
        compiler_params=pltpu.CompilerParams(
            dimension_semantics=("parallel",),
            vmem_limit_bytes=32 * 1024 * 1024,
        ),
        cost_estimate=pl.CostEstimate(
            flops=flops, bytes_accessed=bytes_accessed, transcendentals=0),
    )(x, w0, b0, w1, b1, w2, b2)

    # Strip lane padding; padded columns were computed with zero weights +
    # zero bias so they are exact zeros and never leak into real outputs.
    return out[:, :task_num].astype(jnp.float32)


# ----------------------------------------------------------------------------
# Parameter init (mimics torch.nn.Linear.reset_parameters) + kernel prep.
# ----------------------------------------------------------------------------
def init_linear(key, fan_in, fan_out):
    kw, kb = jax.random.split(key)
    bound = 1.0 / jnp.sqrt(float(fan_in))
    w = jax.random.uniform(kw, (fan_in, fan_out), jnp.float32, -bound, bound)
    b = jax.random.uniform(kb, (1, fan_out), jnp.float32, -bound, bound)
    return w, b


def prep_linear(w, b, pad_out_to=None):
    """bf16 weight; optionally zero-pad the output (matmul-N) dim only."""
    fi, fo = w.shape
    if pad_out_to is None or pad_out_to == fo:
        return w.astype(jnp.bfloat16), b
    wp = jnp.zeros((fi, pad_out_to), jnp.bfloat16).at[:, :fo].set(
        w.astype(jnp.bfloat16))
    bp = jnp.zeros((1, pad_out_to), jnp.float32).at[:, :fo].set(b)
    return wp, bp


def init_task_mlp_params(key, emb_dim, hidden_ls, task_num):
    # TODO(synk): kernel is specialized to the module default num_layer=2
    #             (2 hidden Linear+ReLU layers + output Linear).
    k0, k1, k2 = jax.random.split(key, 3)
    w0, b0 = init_linear(k0, emb_dim, hidden_ls[0])
    w1, b1 = init_linear(k1, hidden_ls[0], hidden_ls[1])
    w2, b2 = init_linear(k2, hidden_ls[1], task_num)
    raw = (w0, b0, w1, b1, w2, b2)
    prepped = (prep_linear(w0, b0)
               + prep_linear(w1, b1)
               + prep_linear(w2, b2, pad_out_to=_round_up(task_num, LANE)))
    return raw, prepped


# ----------------------------------------------------------------------------
# Stand-in encoder (plain JAX glue): projection + segment-mean pooling.
# TODO(synk): the real `encoder` is an arbitrary external GNN passed into
#             Task_MLP.__init__ with no definition here; it is not translated.
# ----------------------------------------------------------------------------
def standin_encoder(x, edge_index, edge_attr, lengths, batch, proj_w, num_graphs):
    node_emb = x @ proj_w                                      # (N, emb_dim)
    ones = jnp.ones((x.shape[0], 1), jnp.float32)
    sums = jax.ops.segment_sum(node_emb, batch, num_segments=num_graphs)
    counts = jax.ops.segment_sum(ones, batch, num_segments=num_graphs)
    graph_emb = sums / jnp.maximum(counts, 1.0)                # (B, emb_dim)
    return node_emb, graph_emb


def task_mlp_forward(x, edge_index, edge_attr, lengths, batch, prepped_params,
                     proj_w, num_graphs, task_num):
    _, graph_emb = standin_encoder(x, edge_index, edge_attr, lengths, batch,
                                   proj_w, num_graphs)
    return task_mlp_head(graph_emb, prepped_params, task_num)


# ----------------------------------------------------------------------------
if __name__ == "__main__":
    key = jax.random.PRNGKey(0)

    # Small, module-consistent sizes.
    B = 2                 # number of graphs
    N = 8                 # total number of nodes
    node_feat = 16        # raw node feature dim (encoder input)
    emb_dim = 32
    hidden_ls = [64, 32]
    task_num = 2

    k_x, k_proj, k_params = jax.random.split(key, 3)

    x = jax.random.normal(k_x, (N, node_feat), jnp.float32)
    edge_index = jnp.zeros((2, 4), jnp.int32)
    edge_attr = jnp.zeros((4, 3), jnp.float32)
    lengths = jnp.array([4, 4], jnp.int32)
    batch = jnp.array([0, 0, 0, 0, 1, 1, 1, 1], jnp.int32)

    proj_w = jax.random.normal(k_proj, (node_feat, emb_dim), jnp.float32) * 0.1
    raw_params, prepped_params = init_task_mlp_params(
        k_params, emb_dim, hidden_ls, task_num)

    pred = task_mlp_forward(x, edge_index, edge_attr, lengths, batch,
                            prepped_params, proj_w, num_graphs=B,
                            task_num=task_num)
    pred = jax.block_until_ready(pred)

    # Reference check in plain f32 JAX (loosened tolerance: bf16 MXU operands
    # and bf16 inter-layer activations).
    _, g = standin_encoder(x, edge_index, edge_attr, lengths, batch, proj_w, B)
    w0, b0, w1, b1, w2, b2 = raw_params
    ref = jnp.maximum(g @ w0 + b0, 0.0)
    ref = jnp.maximum(ref @ w1 + b1, 0.0)
    ref = ref @ w2 + b2

    assert pred.shape == (B, task_num)
    assert jnp.allclose(pred, ref, atol=2e-2, rtol=2e-2), (
        f"max abs err {jnp.max(jnp.abs(pred - ref))}")

    print("KERNEL_OK")
</pallas_src>

<mosaic_0001>
module attributes {stable_mosaic.version = 11 : i64} {
  func.func @task_mlp_kernel(%arg0: i32, %arg1: memref<16x32xbf16, #tpu.memory_space<vmem>>, %arg2: memref<32x64xbf16, #tpu.memory_space<vmem>>, %arg3: memref<1x64xf32, #tpu.memory_space<vmem>>, %arg4: memref<64x32xbf16, #tpu.memory_space<vmem>>, %arg5: memref<1x32xf32, #tpu.memory_space<vmem>>, %arg6: memref<32x128xbf16, #tpu.memory_space<vmem>>, %arg7: memref<1x128xf32, #tpu.memory_space<vmem>>, %arg8: memref<16x128xbf16, #tpu.memory_space<vmem>>) attributes {dimension_semantics = [#tpu.dimension_semantics<parallel>], iteration_bounds = array<i64: 1>, scalar_prefetch = 0 : i64, scratch_operands = 0 : i64, tpu.core_type = #tpu.core_type<tc>, window_params = [{transform_indices = @transform_0, window_bounds = array<i64: 16, 32>}, {pipeline_mode = #tpu.pipeline_mode<synchronous>, transform_indices = @transform_1, window_bounds = array<i64: 32, 64>}, {pipeline_mode = #tpu.pipeline_mode<synchronous>, transform_indices = @transform_2, window_bounds = array<i64: 1, 64>}, {pipeline_mode = #tpu.pipeline_mode<synchronous>, transform_indices = @transform_3, window_bounds = array<i64: 64, 32>}, {pipeline_mode = #tpu.pipeline_mode<synchronous>, transform_indices = @transform_4, window_bounds = array<i64: 1, 32>}, {pipeline_mode = #tpu.pipeline_mode<synchronous>, transform_indices = @transform_5, window_bounds = array<i64: 32, 128>}, {pipeline_mode = #tpu.pipeline_mode<synchronous>, transform_indices = @transform_6, window_bounds = array<i64: 1, 128>}, {transform_indices = @transform_7, window_bounds = array<i64: 16, 128>}]} {
    %c0 = arith.constant 0 : index
    %c0_0 = arith.constant 0 : index
    %0 = vector.load %arg1[%c0, %c0_0] : memref<16x32xbf16, #tpu.memory_space<vmem>>, vector<16x32xbf16>
    %c0_1 = arith.constant 0 : index
    %c0_2 = arith.constant 0 : index
    %1 = vector.load %arg2[%c0_1, %c0_2] : memref<32x64xbf16, #tpu.memory_space<vmem>>, vector<32x64xbf16>
    %cst = arith.constant dense<0.000000e+00> : vector<16x64xf32>
    %2 = tpu.matmul %0, %1, %cst {dimension_numbers = #tpu.dot_dimension_numbers<[1], [0], [0], [1], [0, 0, 1, 1], [], []>} : vector<16x32xbf16>, vector<32x64xbf16>, vector<16x64xf32> -> vector<16x64xf32>
    %c0_3 = arith.constant 0 : index
    %c0_4 = arith.constant 0 : index
    %3 = vector.load %arg3[%c0_3, %c0_4] : memref<1x64xf32, #tpu.memory_space<vmem>>, vector<1x64xf32>
    %4 = vector.broadcast %3 : vector<1x64xf32> to vector<16x64xf32>
    %5 = arith.addf %2, %4 : vector<16x64xf32>
    %cst_5 = arith.constant 0.000000e+00 : f32
    %6 = vector.broadcast %cst_5 : f32 to vector<16x64xf32>
    %7 = arith.maximumf %5, %6 : vector<16x64xf32>
    %8 = arith.truncf %7 : vector<16x64xf32> to vector<16x64xbf16>
    %c0_6 = arith.constant 0 : index
    %c0_7 = arith.constant 0 : index
    %9 = vector.load %arg4[%c0_6, %c0_7] : memref<64x32xbf16, #tpu.memory_space<vmem>>, vector<64x32xbf16>
    %cst_8 = arith.constant dense<0.000000e+00> : vector<16x32xf32>
    %10 = tpu.matmul %8, %9, %cst_8 {dimension_numbers = #tpu.dot_dimension_numbers<[1], [0], [0], [1], [0, 0, 1, 1], [], []>} : vector<16x64xbf16>, vector<64x32xbf16>, vector<16x32xf32> -> vector<16x32xf32>
    %c0_9 = arith.constant 0 : index
    %c0_10 = arith.constant 0 : index
    %11 = vector.load %arg5[%c0_9, %c0_10] : memref<1x32xf32, #tpu.memory_space<vmem>>, vector<1x32xf32>
    %12 = vector.broadcast %11 : vector<1x32xf32> to vector<16x32xf32>
    %13 = arith.addf %10, %12 : vector<16x32xf32>
    %cst_11 = arith.constant 0.000000e+00 : f32
    %14 = vector.broadcast %cst_11 : f32 to vector<16x32xf32>
    %15 = arith.maximumf %13, %14 : vector<16x32xf32>
    %16 = arith.truncf %15 : vector<16x32xf32> to vector<16x32xbf16>
    %c0_12 = arith.constant 0 : index
    %c0_13 = arith.constant 0 : index
    %17 = vector.load %arg6[%c0_12, %c0_13] : memref<32x128xbf16, #tpu.memory_space<vmem>>, vector<32x128xbf16>
    %cst_14 = arith.constant dense<0.000000e+00> : vector<16x128xf32>
    %18 = tpu.matmul %16, %17, %cst_14 {dimension_numbers = #tpu.dot_dimension_numbers<[1], [0], [0], [1], [0, 0, 1, 1], [], []>} : vector<16x32xbf16>, vector<32x128xbf16>, vector<16x128xf32> -> vector<16x128xf32>
    %c0_15 = arith.constant 0 : index
    %c0_16 = arith.constant 0 : index
    %19 = vector.load %arg7[%c0_15, %c0_16] : memref<1x128xf32, #tpu.memory_space<vmem>>, vector<1x128xf32>
    %20 = vector.broadcast %19 : vector<1x128xf32> to vector<16x128xf32>
    %21 = arith.addf %18, %20 : vector<16x128xf32>
    %22 = arith.truncf %21 : vector<16x128xf32> to vector<16x128xbf16>
    %c0_17 = arith.constant 0 : index
    %c0_18 = arith.constant 0 : index
    %23 = vector.load %arg8[%c0_17, %c0_18] : memref<16x128xbf16, #tpu.memory_space<vmem>>, vector<16x128xbf16>
    tpu.vector_store %arg8[%c0_17, %c0_18], %22 {strides = array<i32>} : memref<16x128xbf16, #tpu.memory_space<vmem>>, vector<16x128xbf16>,
    return
  }
  func.func @transform_0(%arg0: i32) -> (i32, i32) {
    %c0_i32 = arith.constant 0 : i32
    %c0_i32_0 = arith.constant 0 : i32
    return %arg0, %c0_i32 : i32, i32
  }
  func.func @transform_1(%arg0: i32) -> (i32, i32) {
    %c0_i32 = arith.constant 0 : i32
    %c0_i32_0 = arith.constant 0 : i32
    %c0_i32_1 = arith.constant 0 : i32
    return %c0_i32, %c0_i32_0 : i32, i32
  }
  func.func @transform_2(%arg0: i32) -> (i32, i32) {
    %c0_i32 = arith.constant 0 : i32
    %c0_i32_0 = arith.constant 0 : i32
    %c0_i32_1 = arith.constant 0 : i32
    return %c0_i32, %c0_i32_0 : i32, i32
  }
  func.func @transform_3(%arg0: i32) -> (i32, i32) {
    %c0_i32 = arith.constant 0 : i32
    %c0_i32_0 = arith.constant 0 : i32
    %c0_i32_1 = arith.constant 0 : i32
    return %c0_i32, %c0_i32_0 : i32, i32
  }
  func.func @transform_4(%arg0: i32) -> (i32, i32) {
    %c0_i32 = arith.constant 0 : i32
    %c0_i32_0 = arith.constant 0 : i32
    %c0_i32_1 = arith.constant 0 : i32
    return %c0_i32, %c0_i32_0 : i32, i32
  }
  func.func @transform_5(%arg0: i32) -> (i32, i32) {
    %c0_i32 = arith.constant 0 : i32
    %c0_i32_0 = arith.constant 0 : i32
    %c0_i32_1 = arith.constant 0 : i32
    return %c0_i32, %c0_i32_0 : i32, i32
  }
  func.func @transform_6(%arg0: i32) -> (i32, i32) {
    %c0_i32 = arith.constant 0 : i32
    %c0_i32_0 = arith.constant 0 : i32
    %c0_i32_1 = arith.constant 0 : i32
    return %c0_i32, %c0_i32_0 : i32, i32
  }
  func.func @transform_7(%arg0: i32) -> (i32, i32) {
    %c0_i32 = arith.constant 0 : i32
    %c0_i32_0 = arith.constant 0 : i32
    return %arg0, %c0_i32 : i32, i32
  }
}

</mosaic_0001>

<llo_original>
// kernel: tpu_custom_call.1
$region0: #{tpu_custom_call.1}
  #allocation0 [shape = 'u32[]', space=smem, size = 0x4, offset = 0x4, fixed_abs, tag = 'smem constant byte address 0x4 - core index']
  #allocation1 [shape = 'u32[72,128]{1,0:T(1,128)}', space=vmem, size = 0x9000, scoped, tag = 'internal scratch']
  %s0 = inlined_call_operand.vmem [shape: bf16[2,32], index: 0, kind: input, shape index: {}]
  %s1 = inlined_call_operand.vmem [shape: bf16[32,64], index: 1, kind: input, shape index: {}]
  %s2 = inlined_call_operand.vmem [shape: f32[1,64], index: 2, kind: input, shape index: {}]
  %s3 = inlined_call_operand.vmem [shape: bf16[64,32], index: 3, kind: input, shape index: {}]
  %s4 = inlined_call_operand.vmem [shape: f32[1,32], index: 4, kind: input, shape index: {}]
  %s5 = inlined_call_operand.vmem [shape: bf16[32,128], index: 5, kind: input, shape index: {}]
  %s6 = inlined_call_operand.vmem [shape: f32[1,128], index: 6, kind: input, shape index: {}]
  %s7 = inlined_call_operand.hbm [shape: bf16[2,128], index: 7, kind: output, shape index: {}]
  %s8 = sld [smem:[#allocation0]]
  $region38: #{tpu_custom_call.1} parent=0
    _
  %s10 = ssub.s32 1, %s8
  %s11 = scalar_select 0, %s10, %s8
  $region1: #{tpu_custom_call.1} parent=0
    #allocation2 [shape = 'u8[4096]{0}', space=vmem, size = 0x1000, scoped, tag = 'output window, operand 0, single buffered']
    #allocation3 [shape = 's32[1]{0}', space=sflag, size = 0x4, scoped, tag = 'scoped memory for tpu_custom_call.1']
    %12 = vsyncpa [#allocation3], 0
    // Predicated region
    $region2: #{tpu_custom_call.1} parent=1 // pred_check
      _
    $region3: #{tpu_custom_call.1} parent=1 // pred_check_branch
      %14 = sbr.rel (0) target = $region5
    $region4: #{tpu_custom_call.1} parent=1 // pred_region
      _
    $region5: #{tpu_custom_call.1} parent=1 // pred_fallthru
      _
    // Predicated region
    $region6: #{tpu_custom_call.1} parent=1 // pred_check
      _
    $region7: #{tpu_custom_call.1} parent=1 // pred_check_branch
      %16 = sbr.rel (0) target = $region9
    $region8: #{tpu_custom_call.1} parent=1 // pred_region
      _
    $region9: #{tpu_custom_call.1} parent=1 // pred_fallthru
      _
    // Predicated region
    $region10: #{tpu_custom_call.1} parent=1 // pred_check
      _
    $region11: #{tpu_custom_call.1} parent=1 // pred_check_branch
      %18 = sbr.rel (0) target = $region13
    $region12: #{tpu_custom_call.1} parent=1 // pred_region
      _
    $region13: #{tpu_custom_call.1} parent=1 // pred_fallthru
      _
    // Predicated region
    $region14: #{tpu_custom_call.1} parent=1 // pred_check
      _
    $region15: #{tpu_custom_call.1} parent=1 // pred_check_branch
      %20 = sbr.rel (0) target = $region17
    $region16: #{tpu_custom_call.1} parent=1 // pred_region
      _
    $region17: #{tpu_custom_call.1} parent=1 // pred_fallthru
      _
    // Predicated region
    $region18: #{tpu_custom_call.1} parent=1 // pred_check
      _
    $region19: #{tpu_custom_call.1} parent=1 // pred_check_branch
      %22 = sbr.rel (0) target = $region21
    $region20: #{tpu_custom_call.1} parent=1 // pred_region
      _
    $region21: #{tpu_custom_call.1} parent=1 // pred_fallthru
      _
    // Predicated region
    $region22: #{tpu_custom_call.1} parent=1 // pred_check
      _
    $region23: #{tpu_custom_call.1} parent=1 // pred_check_branch
      %24 = sbr.rel (0) target = $region25
    $region24: #{tpu_custom_call.1} parent=1 // pred_region
      _
    $region25: #{tpu_custom_call.1} parent=1 // pred_fallthru
      _
    // Predicated region
    $region26: #{tpu_custom_call.1} parent=1 // pred_check
      _
    $region27: #{tpu_custom_call.1} parent=1 // pred_check_branch
      %26 = sbr.rel (0) target = $region29
    $region28: #{tpu_custom_call.1} parent=1 // pred_region
      _
    $region29: #{tpu_custom_call.1} parent=1 // pred_fallthru
      _
    %v28 = vld [vmem:[%s0] sm:$0x1]
    %v29 = vld [vmem:[%s0 + $0x1] sm:$0x1]
    %v30 = vld [vmem:[%s0 + $0x2] sm:$0x1]
    %v31 = vld [vmem:[%s0 + $0x3] sm:$0x1]
    %v32 = vld [vmem:[%s0 + $0x4] sm:$0x1]
    %v33 = vld [vmem:[%s0 + $0x5] sm:$0x1]
    %v34 = vld [vmem:[%s0 + $0x6] sm:$0x1]
    %v35 = vld [vmem:[%s0 + $0x7] sm:$0x1]
    %v36 = vld [vmem:[%s1] sm:$0xf]
    %v37 = vld [vmem:[%s1 + $0x4] sm:$0xf]
    %v38 = vld [vmem:[%s1 + $0x8] sm:$0xf]
    %v39 = vld [vmem:[%s1 + $0xc] sm:$0xf]
    %v40 = vld [vmem:[%s2] sm:$0x1]
    %v42 = vperm.slane %v40, 0
    %45 = vst [vmem:[#allocation1] ss:$9 sm:$0xff] %v28
    %s47 = scalar_lea.vmem [#allocation1], 1
    %48 = vst [vmem:[%s47] ss:$9 sm:$0xff] %v29
    %s50 = scalar_lea.vmem [#allocation1], 2
    %51 = vst [vmem:[%s50] ss:$9 sm:$0xff] %v30
    %s53 = scalar_lea.vmem [#allocation1], 3
    %54 = vst [vmem:[%s53] ss:$9 sm:$0xff] %v31
    %s56 = scalar_lea.vmem [#allocation1], 4
    %57 = vst [vmem:[%s56] ss:$9 sm:$0xff] %v32
    %s59 = scalar_lea.vmem [#allocation1], 5
    %60 = vst [vmem:[%s59] ss:$9 sm:$0xff] %v33
    %s62 = scalar_lea.vmem [#allocation1], 6
    %63 = vst [vmem:[%s62] ss:$9 sm:$0xff] %v34
    %s65 = scalar_lea.vmem [#allocation1], 7
    %66 = vst [vmem:[%s65] ss:$9 sm:$0xff] %v35
    %v67 = vld [vmem:[#allocation1] sm:$0xff]
    %v72 = vunpack.c.l.b16 %v36
    %v73 = vunpack.c.l.b16 %v37
    %v74 = vunpack.c.l.b16 %v38
    %v75 = vunpack.c.l.b16 %v39
    %v76 = vpack.c.b16 %v73, %v72
    %v77 = vpack.c.b16 %v75, %v74
    %vm80 = vcmask 261120
    %v81 = vsel %vm80, %v67, 0
    %83 = vmatpush.bf16.msra.mxu0 0
    %84 = vmatpush.bf16.msra.mxu0 0
    %85 = vmatpush.bf16.msra.mxu0 0
    %86 = vmatpush.bf16.msra.mxu0 0
    %87 = vmatpush.bf16.msra.mxu0 0
    %88 = vmatpush.bf16.msra.mxu0 0
    %89 = vmatpush.bf16.msra.mxu0 %v77
    %90 = vmatpush.bf16.msra.mxu0 %v76
    %91 = vmatmul.bf16.gmra.mxu0 %v81
    %v92 = vpop.f32.mrf.mxu0
    %v93 = vadd.f32 %v42, %v92
    %v94 = vpop.f32.mrf.mxu0
    %v95 = vadd.f32 %v42, %v94
    %96 = vdwg.mxu0
    %v97 = vmax.f32 %v93, 0.0
    %v98 = vmax.f32 %v95, 0.0
    %v99 = vpack.c.bf16 %v98, %v97
    %v100 = vld [vmem:[%s3] sm:$0xf]
    %v101 = vld [vmem:[%s3 + $0x4] sm:$0xf]
    %v102 = vld [vmem:[%s3 + $0x8] sm:$0xf]
    %v103 = vld [vmem:[%s3 + $0xc] sm:$0xf]
    %v104 = vld [vmem:[%s3 + $0x10] sm:$0xf]
    %v105 = vld [vmem:[%s3 + $0x14] sm:$0xf]
    %v106 = vld [vmem:[%s3 + $0x18] sm:$0xf]
    %v107 = vld [vmem:[%s3 + $0x1c] sm:$0xf]
    %v108 = vld [vmem:[%s4] sm:$0x1]
    %v110 = vperm.slane %v108, 0
    %v120 = vunpack.c.l.b16 %v100
    %v121 = vunpack.c.l.b16 %v101
    %v122 = vunpack.c.l.b16 %v102
    %v123 = vunpack.c.l.b16 %v103
    %v124 = vunpack.c.l.b16 %v104
    %v125 = vunpack.c.l.b16 %v105
    %v126 = vunpack.c.l.b16 %v106
    %v127 = vunpack.c.l.b16 %v107
    %v128 = vpack.c.b16 %v121, %v120
    %v129 = vpack.c.b16 %v123, %v122
    %v130 = vpack.c.b16 %v125, %v124
    %v131 = vpack.c.b16 %v127, %v126
    %vm136 = vcmask 523264
    %v138 = vsel %vm136, %v99, 0
    %140 = vmatpush.bf16.msra.mxu0 0
    %141 = vmatpush.bf16.msra.mxu0 0
    %142 = vmatpush.bf16.msra.mxu0 0
    %143 = vmatpush.bf16.msra.mxu0 0
    %144 = vmatpush.bf16.msra.mxu0 %v131
    %145 = vmatpush.bf16.msra.mxu0 %v130
    %146 = vmatpush.bf16.msra.mxu0 %v129
    %147 = vmatpush.bf16.msra.mxu0 %v128
    %148 = vmatmul.bf16.gmra.mxu0 %v138
    %v149 = vpop.f32.mrf.mxu0
    %v150 = vadd.f32 %v110, %v149
    %v151 = vpop.f32.mrf.mxu0
    %v152 = vadd.f32 %v110, %v151
    %153 = vdwg.mxu0
    %v154 = vmax.f32 %v150, 0.0
    %v155 = vmax.f32 %v152, 0.0
    %v156 = vpack.c.bf16 %v155, %v154
    %v157 = vld [vmem:[%s5] sm:$0xf]
    %v158 = vld [vmem:[%s5 + $0x4] sm:$0xf]
    %v159 = vld [vmem:[%s5 + $0x8] sm:$0xf]
    %v160 = vld [vmem:[%s5 + $0xc] sm:$0xf]
    %v161 = vld [vmem:[%s6] sm:$0x1]
    %v163 = vperm.slane %v161, 0
    %v169 = vunpack.c.l.b16 %v157
    %v170 = vunpack.c.l.b16 %v158
    %v171 = vunpack.c.l.b16 %v159
    %v172 = vunpack.c.l.b16 %v160
    %v173 = vpack.c.b16 %v170, %v169
    %v174 = vpack.c.b16 %v172, %v171
    %v178 = vsel %vm80, %v156, 0
    %180 = vmatpush.bf16.msra.mxu0 0
    %181 = vmatpush.bf16.msra.mxu0 0
    %182 = vmatpush.bf16.msra.mxu0 0
    %183 = vmatpush.bf16.msra.mxu0 0
    %184 = vmatpush.bf16.msra.mxu0 0
    %185 = vmatpush.bf16.msra.mxu0 0
    %186 = vmatpush.bf16.msra.mxu0 %v174
    %187 = vmatpush.bf16.msra.mxu0 %v173
    %188 = vmatmul.bf16.gmra.mxu0 %v178
    %v189 = vpop.f32.mrf.mxu0
    %v190 = vadd.f32 %v163, %v189
    %v191 = vpop.f32.mrf.mxu0
    %v192 = vadd.f32 %v163, %v191
    %193 = vdwg.mxu0
    %v194 = vpack.c.bf16 %v190, %v190
    %v195 = vpack.c.bf16 %v192, %v192
    %v198 = vrot.slane %v194, 3
    %v199 = vrot.slane %v195, 3
    %vm200 = vcmask 1040384
    %v203 = vsel %vm200, %v194, %v198
    %vm204 = vcmask 1041409
    %v205 = vsel %vm204, %v194, %v198
    %v207 = vrot.slane %v205, 1
    %vm208 = vcmask 1042434
    %v209 = vsel %vm208, %v194, %v198
    %v211 = vrot.slane %v209, 2
    %vm212 = vcmask 1043459
    %v213 = vsel %vm212, %v194, %v198
    %v215 = vrot.slane %v213, 3
    %v218 = vsel %vm200, %v195, %v199
    %v219 = vsel %vm204, %v195, %v199
    %v221 = vrot.slane %v219, 1
    %v222 = vsel %vm208, %v195, %v199
    %v224 = vrot.slane %v222, 2
    %v225 = vsel %vm212, %v195, %v199
    %v227 = vrot.slane %v225, 3
    %236 = vst [vmem:[#allocation2] sm:$0x1] %v203
    %237 = vst [vmem:[#allocation2 + $0x1] sm:$0x1] %v207
    %238 = vst [vmem:[#allocation2 + $0x2] sm:$0x1] %v211
    %239 = vst [vmem:[#allocation2 + $0x3] sm:$0x1] %v215
    %240 = vst [vmem:[#allocation2 + $0x4] sm:$0x1] %v218
    %241 = vst [vmem:[#allocation2 + $0x5] sm:$0x1] %v221
    %242 = vst [vmem:[#allocation2 + $0x6] sm:$0x1] %v224
    %243 = vst [vmem:[#allocation2 + $0x7] sm:$0x1] %v227
    // Predicated region
    $region30: #{tpu_custom_call.1} parent=1 // pred_check
      _
    $region31: #{tpu_custom_call.1} parent=1 // pred_check_branch
      %245 = sbr.rel (0) target = $region33
    $region32: #{tpu_custom_call.1} parent=1 // pred_region
      %247 = vsyncadd [#allocation3], 112
      %s248 = sshll.u32 [#allocation2], 4
      %s249 = int_to_ptr.vmem [resolvable:$true] %s248
      %s250 = sshll.u32 %s7, 4
      %s251 = int_to_ptr.hbm [resolvable:$true] %s250
      %256 = dma.vmem_to_hbm [thread:$0]  %s249, 16, %s251, [#allocation3], 16, 16, 1
    $region33: #{tpu_custom_call.1} parent=1 // pred_fallthru
      _
    // Predicated region
    $region34: #{tpu_custom_call.1} parent=1 // pred_check
      _
    $region35: #{tpu_custom_call.1} parent=1 // pred_check_branch
      %258 = sbr.rel (0) target = $region37
    $region36: #{tpu_custom_call.1} parent=1 // pred_region
      %260 = dma.done [#allocation3], 128
    $region37: #{tpu_custom_call.1} parent=1 // pred_fallthru
      _
    %261 = vsyncpa [#allocation3], 1

</llo_original>
